<compile_context>
chip_gen: v7x
topology: tpu7x:2x2x1
jax: 0.10.0
libtpu: 0.0.40
codegen_flags: <defaults>
</compile_context>

<pallas_src>
import functools

import jax
import jax.numpy as jnp
from jax import lax
from jax.experimental import pallas as pl
from jax.experimental.pallas import tpu as pltpu

NEG_SLOPE = 0.01  # nn.LeakyReLU default negative slope


def _round_up(x, m):
    return ((x + m - 1) // m) * m


def _seq_chunk(t, cap=128):
    """Largest divisor of t that is <= cap (GRU time-chunk size)."""
    c = min(t, cap)
    while t % c:
        c -= 1
    return c


def _lrelu(y):
    return jnp.maximum(y, NEG_SLOPE * y)


# --------------------------------------------------------------------------
# Tiled matmul (+bias, +LeakyReLU) kernel
# --------------------------------------------------------------------------

def _matmul_kernel(a_ref, b_ref, bias_ref, o_ref, acc_ref, *, act):
    @pl.when(pl.program_id(2) == 0)
    def _():
        acc_ref[...] = jnp.zeros_like(acc_ref)

    acc_ref[...] += jnp.dot(a_ref[...], b_ref[...],
                            preferred_element_type=jnp.float32)

    @pl.when(pl.program_id(2) == pl.num_programs(2) - 1)
    def _():
        y = acc_ref[...] + bias_ref[...]
        if act:
            y = _lrelu(y)
        o_ref[...] = y


@functools.lru_cache(maxsize=None)
def _matmul_call(Mp, Kp, Np, tm, tk, tn, act):
    return pl.pallas_call(
        functools.partial(_matmul_kernel, act=act),
        out_shape=jax.ShapeDtypeStruct((Mp, Np), jnp.float32),
        grid=(Mp // tm, Np // tn, Kp // tk),
        in_specs=[pl.BlockSpec((tm, tk), lambda i, j, k: (i, k)),
                  pl.BlockSpec((tk, tn), lambda i, j, k: (k, j)),
                  pl.BlockSpec((1, tn), lambda i, j, k: (0, j))],
        out_specs=pl.BlockSpec((tm, tn), lambda i, j, k: (i, j)),
        scratch_shapes=[pltpu.VMEM((tm, tn), jnp.float32)],
        compiler_params=pltpu.CompilerParams(
            dimension_semantics=("parallel", "parallel", "arbitrary")),
    )


def matmul_bias(a, b, bias, act=False):
    """a: (M, K); b: (K, N); bias: (N,). Returns (M, N) f32.  MXU in bf16."""
    M, K = a.shape
    N = b.shape[1]
    a = a.astype(jnp.bfloat16)
    b = b.astype(jnp.bfloat16)
    tm = 256 if M >= 256 else _round_up(M, 8)
    Mp = _round_up(M, tm)
    tk = 512 if K >= 512 else _round_up(K, 128)
    Kp = _round_up(K, tk)
    tn = 256 if N >= 256 else _round_up(N, 128)
    Np = _round_up(N, tn)

    a_p = a if (Mp == M and Kp == K) else jnp.pad(a, ((0, Mp - M), (0, Kp - K)))
    b_p = b if (Kp == K and Np == N) else jnp.pad(b, ((0, Kp - K), (0, Np - N)))
    bias_p = bias.reshape(1, N).astype(jnp.float32)
    if Np != N:
        bias_p = jnp.pad(bias_p, ((0, 0), (0, Np - N)))

    out = _matmul_call(Mp, Kp, Np, tm, tk, tn, bool(act))(a_p, b_p, bias_p)
    if Mp != M or Np != N:
        out = out[:M, :N]
    return out


# --------------------------------------------------------------------------
# Stride-1 Conv1d kernel (ks shifted matmuls, grouped via grid axis)
# --------------------------------------------------------------------------

def _conv_s1_kernel(x_ref, w_ref, b_ref, o_ref, *, ks, act):
    # x_ref: (1,1,Tp,Cin_g) bf16, w_ref: (1,ks,Cin_g,tn) bf16,
    # b_ref: (1,1,tn) f32, o_ref: (1,1,T_out,tn) f32
    t_out = o_ref.shape[2]
    x = x_ref[0, 0]                                    # (Tp, Cin_g) bf16
    acc = jnp.zeros((t_out, o_ref.shape[3]), jnp.float32)
    for k in range(ks):
        acc = acc + jnp.dot(x[k:k + t_out, :], w_ref[0, k],
                            preferred_element_type=jnp.float32)
    y = acc + b_ref[0]
    if act:
        y = _lrelu(y)
    o_ref[0, 0] = y


@functools.lru_cache(maxsize=None)
def _conv_s1_call(B, G, Tp, Cin_g, Np, tn, ks, T_out, act):
    return pl.pallas_call(
        functools.partial(_conv_s1_kernel, ks=ks, act=act),
        out_shape=jax.ShapeDtypeStruct((B, G, T_out, Np), jnp.float32),
        grid=(B, G, Np // tn),
        in_specs=[pl.BlockSpec((1, 1, Tp, Cin_g), lambda b, g, j: (b, g, 0, 0)),
                  pl.BlockSpec((1, ks, Cin_g, tn), lambda b, g, j: (g, 0, 0, j)),
                  pl.BlockSpec((1, 1, tn), lambda b, g, j: (g, 0, j))],
        out_specs=pl.BlockSpec((1, 1, T_out, tn), lambda b, g, j: (b, g, 0, j)),
        compiler_params=pltpu.CompilerParams(
            dimension_semantics=("parallel", "parallel", "parallel")),
    )


def _conv1d_s1(x, w, b, padding, groups, act):
    """stride=1 / dilation=1 conv. x: (B,Cin,T), w: (Cout,Cin//G,ks), b: (Cout,)."""
    B, Cin, T = x.shape
    Cout, Cin_g, ks = w.shape
    G = groups
    Cout_g = Cout // G
    Tp = T + 2 * padding
    T_out = Tp - (ks - 1)

    x_pad = jnp.pad(x, ((0, 0), (0, 0), (padding, padding)))        # (B,Cin,Tp)
    xt = jnp.transpose(x_pad, (0, 2, 1))                            # (B,Tp,Cin)
    xt = xt.reshape(B, Tp, G, Cin_g).transpose(0, 2, 1, 3)          # (B,G,Tp,Cin_g)
    xt = xt.astype(jnp.bfloat16)

    Np = _round_up(Cout_g, 128)
    wr = w.reshape(G, Cout_g, Cin_g, ks).transpose(0, 3, 2, 1)      # (G,ks,Cin_g,Cout_g)
    if Np != Cout_g:
        wr = jnp.pad(wr, ((0, 0), (0, 0), (0, 0), (0, Np - Cout_g)))
    wr = wr.astype(jnp.bfloat16)
    br = b.reshape(G, Cout_g)
    if Np != Cout_g:
        br = jnp.pad(br, ((0, 0), (0, Np - Cout_g)))
    br = br.reshape(G, 1, Np)
    tn = 256 if Np % 256 == 0 else 128

    out = _conv_s1_call(B, G, Tp, Cin_g, Np, tn, ks, T_out, bool(act))(xt, wr, br)
    if Np != Cout_g:
        out = out[..., :Cout_g]                                     # (B,G,T_out,Cout_g)
    out = out.transpose(0, 1, 3, 2).reshape(B, Cout, T_out)
    return out


def _conv1d_im2col(x, w, b, stride, padding, dilation, groups, act):
    """Generic conv via im2col + tiled matmul (used for the stride-2 ks=4 conv)."""
    B, Cin, T = x.shape
    Cout, Cin_g, ks = w.shape
    Cout_g = Cout // groups
    x_pad = jnp.pad(x, ((0, 0), (0, 0), (padding, padding))).astype(jnp.bfloat16)
    T_out = (T + 2 * padding - dilation * (ks - 1) - 1) // stride + 1
    gather_idx = jnp.arange(T_out)[:, None] * stride + jnp.arange(ks)[None, :] * dilation
    outs = []
    for g in range(groups):
        xg = x_pad[:, g * Cin_g:(g + 1) * Cin_g, :]
        patches = xg[:, :, gather_idx]                              # (B,Cin_g,T_out,ks)
        patches = patches.transpose(0, 2, 1, 3).reshape(B * T_out, Cin_g * ks)
        wg = w[g * Cout_g:(g + 1) * Cout_g].reshape(Cout_g, Cin_g * ks).T
        bg = b[g * Cout_g:(g + 1) * Cout_g]
        o = matmul_bias(patches, wg, bg, act=act)                   # (B*T_out, Cout_g)
        outs.append(o.reshape(B, T_out, Cout_g))
    out = outs[0] if groups == 1 else jnp.concatenate(outs, axis=2)
    return jnp.transpose(out, (0, 2, 1))


def conv1d(x, w, b, stride=1, padding=0, dilation=1, groups=1, act=False):
    if stride == 1 and dilation == 1:
        return _conv1d_s1(x, w, b, padding, groups, act)
    return _conv1d_im2col(x, w, b, stride, padding, dilation, groups, act)


# --------------------------------------------------------------------------
# Fused stride-1 Conv1d + GroupNorm + LeakyReLU kernel
#   grid = (batch, GN group); each instance produces exactly one GN group's
#   (T_out, Cg) slab, so the normalization statistics never leave VMEM.
# --------------------------------------------------------------------------

def _conv_s1_gn_kernel(x_ref, w_ref, b_ref, g_ref, be_ref, o_ref, *, ks, cg, eps):
    # x_ref:  (1,1,Tp,Cin_g) bf16     w_ref: (1,ks,Cin_g,Cgp) bf16
    # b_ref / g_ref / be_ref: (1,1,Cgp) f32 (zero-padded past cg)
    # o_ref:  (1,1,T_out,Cgp) f32
    t_out = o_ref.shape[2]
    cgp = o_ref.shape[3]
    x = x_ref[0, 0]                                    # (Tp, Cin_g)
    acc = jnp.zeros((t_out, cgp), jnp.float32)
    for k in range(ks):
        acc = acc + jnp.dot(x[k:k + t_out, :], w_ref[0, k],
                            preferred_element_type=jnp.float32)
    acc = acc + b_ref[0]                               # conv bias before GN

    if cg < cgp:
        col = lax.broadcasted_iota(jnp.int32, (t_out, cgp), 1)
        mask = (col < cg).astype(jnp.float32)
    else:
        mask = None
    cnt = float(cg * t_out)
    acc_m = acc if mask is None else acc * mask
    s = jnp.sum(jnp.sum(acc_m, axis=1, keepdims=True), axis=0, keepdims=True)
    mean = s / cnt
    d = acc - mean
    if mask is not None:
        d = d * mask
    v = jnp.sum(jnp.sum(d * d, axis=1, keepdims=True), axis=0, keepdims=True)
    y = d * lax.rsqrt(v / cnt + eps) * g_ref[0] + be_ref[0]
    o_ref[0, 0] = _lrelu(y)


@functools.lru_cache(maxsize=None)
def _conv_s1_gn_call(B, Gn, Tp, Cin_g, Cgp, ks, T_out, cg, eps, ratio):
    return pl.pallas_call(
        functools.partial(_conv_s1_gn_kernel, ks=ks, cg=cg, eps=eps),
        out_shape=jax.ShapeDtypeStruct((B, Gn, T_out, Cgp), jnp.float32),
        grid=(B, Gn),
        in_specs=[pl.BlockSpec((1, 1, Tp, Cin_g),
                               lambda b, g: (b, g // ratio, 0, 0)),
                  pl.BlockSpec((1, ks, Cin_g, Cgp), lambda b, g: (g, 0, 0, 0)),
                  pl.BlockSpec((1, 1, Cgp), lambda b, g: (g, 0, 0)),
                  pl.BlockSpec((1, 1, Cgp), lambda b, g: (g, 0, 0)),
                  pl.BlockSpec((1, 1, Cgp), lambda b, g: (g, 0, 0))],
        out_specs=pl.BlockSpec((1, 1, T_out, Cgp), lambda b, g: (b, g, 0, 0)),
        compiler_params=pltpu.CompilerParams(
            dimension_semantics=("parallel", "parallel")),
    )


def conv1d_gn_lrelu(x, w, b, gamma, beta, padding, conv_groups, gn_groups, eps=1e-5):
    """Fused stride-1 conv -> GroupNorm(gn_groups) -> LeakyReLU."""
    B, Cin, T = x.shape
    Cout, Cin_g, ks = w.shape
    Gc = conv_groups
    Gn = gn_groups
    cg = Cout // Gn                       # channels per GN group
    Tp = T + 2 * padding
    T_out = Tp - (ks - 1)

    x_pad = jnp.pad(x, ((0, 0), (0, 0), (padding, padding)))
    xt = jnp.transpose(x_pad, (0, 2, 1)).reshape(B, Tp, Gc, Cin_g)
    xt = xt.transpose(0, 2, 1, 3).astype(jnp.bfloat16)              # (B,Gc,Tp,Cin_g)

    Cgp = _round_up(cg, 128)
    # Output channels are conv-group-major, so a straight reshape lands each GN
    # group inside a single conv group (Gc is 1 or Gn here).
    wr = w.reshape(Gn, cg, Cin_g, ks).transpose(0, 3, 2, 1)          # (Gn,ks,Cin_g,cg)
    if Cgp != cg:
        wr = jnp.pad(wr, ((0, 0), (0, 0), (0, 0), (0, Cgp - cg)))
    wr = wr.astype(jnp.bfloat16)

    def pad_vec(v):
        vr = v.reshape(Gn, cg).astype(jnp.float32)
        if Cgp != cg:
            vr = jnp.pad(vr, ((0, 0), (0, Cgp - cg)))
        return vr.reshape(Gn, 1, Cgp)

    br, gr, ber = pad_vec(b), pad_vec(gamma), pad_vec(beta)
    ratio = Gn // Gc                      # GN groups per conv group

    out = _conv_s1_gn_call(B, Gn, Tp, Cin_g, Cgp, ks, T_out, cg, float(eps),
                           ratio)(xt, wr, br, gr, ber)               # (B,Gn,T_out,Cgp)
    if Cgp != cg:
        out = out[..., :cg]
    out = out.transpose(0, 1, 3, 2).reshape(B, Cout, T_out)
    return out


# --------------------------------------------------------------------------
# Encode-path statistics kernels
# --------------------------------------------------------------------------

def _encode_norm_kernel(x_ref, xn_ref, std_ref):
    x = x_ref[0]                                                   # (C, T)
    mean = jnp.sum(x, axis=1, keepdims=True) / x.shape[1]
    xc = x - mean
    std = jnp.sqrt(jnp.sum(xc * xc, axis=1, keepdims=True)) + 1e-4  # torch.norm(dim=2)+1e-4
    xs = xc / std
    cn = jnp.sqrt(jnp.sum(xs * xs, axis=0, keepdims=True))          # channel L2 norm
    xn_ref[0] = xs / cn
    std_ref[0] = std


@functools.lru_cache(maxsize=None)
def _encode_norm_call(B, C, T):
    return pl.pallas_call(
        _encode_norm_kernel,
        out_shape=(jax.ShapeDtypeStruct((B, C, T), jnp.float32),
                   jax.ShapeDtypeStruct((B, C, 1), jnp.float32)),
        grid=(B,),
        in_specs=[pl.BlockSpec((1, C, T), lambda i: (i, 0, 0))],
        out_specs=(pl.BlockSpec((1, C, T), lambda i: (i, 0, 0)),
                   pl.BlockSpec((1, C, 1), lambda i: (i, 0, 0))),
        compiler_params=pltpu.CompilerParams(dimension_semantics=("parallel",)),
    )


def _sp_embed_kernel(x_ref, q_ref, o_ref):
    d = x_ref[0] - q_ref[0]                                        # (C, T)
    m = jnp.sum(d, axis=1, keepdims=True) / d.shape[1]             # mean over time
    nrm = jnp.sqrt(jnp.sum(m * m, axis=0, keepdims=True)) + 1e-4
    o_ref[0] = m / nrm / 3.0


@functools.lru_cache(maxsize=None)
def _sp_embed_call(B, C, T):
    return pl.pallas_call(
        _sp_embed_kernel,
        out_shape=jax.ShapeDtypeStruct((B, C, 1), jnp.float32),
        grid=(B,),
        in_specs=[pl.BlockSpec((1, C, T), lambda i: (i, 0, 0)),
                  pl.BlockSpec((1, C, T), lambda i: (i, 0, 0))],
        out_specs=pl.BlockSpec((1, C, 1), lambda i: (i, 0, 0)),
        compiler_params=pltpu.CompilerParams(dimension_semantics=("parallel",)),
    )


# --------------------------------------------------------------------------
# Quantize kernel (gridded over M, codebook pre-normalized in glue)
# --------------------------------------------------------------------------

def _quantize_kernel(x_ref, en_ref, w_ref, q_ref, d_ref, acc_ref, *, M, D, Ne, tm):
    i = pl.program_id(0)

    @pl.when(i == 0)
    def _():
        acc_ref[...] = jnp.zeros_like(acc_ref)

    x = x_ref[...]                                                 # (tm, Dp) f32
    # argmax of x @ embed_normalized == argmin of the reference distance
    # (x^2 and |e|^2==1 terms are per-row / constant).  Kept in f32 for ties.
    scores = jnp.dot(x, en_ref[...], preferred_element_type=jnp.float32)
    col = lax.broadcasted_iota(jnp.int32, scores.shape, 1)
    scores = jnp.where(col < Ne, scores, -1e30)                    # mask padded codes
    smax = jnp.max(scores, axis=1, keepdims=True)
    first = jnp.min(jnp.where(scores == smax, col, scores.shape[1]),
                    axis=1, keepdims=True)                         # first argmax (torch .max)
    onehot = (col == first).astype(jnp.float32)
    q = jnp.dot(onehot, w_ref[...], preferred_element_type=jnp.float32)
    q_ref[...] = q

    row = lax.broadcasted_iota(jnp.int32, (x.shape[0], 1), 0) + i * tm
    err = (q - x) ** 2 * (row < M).astype(jnp.float32)             # mask padded rows
    acc_ref[...] += jnp.sum(jnp.sum(err, axis=1, keepdims=True), axis=0, keepdims=True)

    @pl.when(i == pl.num_programs(0) - 1)
    def _():
        d_ref[...] = acc_ref[...] / (M * D)


@functools.lru_cache(maxsize=None)
def _quantize_call(Mp, Dp, Nep, tm, M, D, Ne):
    return pl.pallas_call(
        functools.partial(_quantize_kernel, M=M, D=D, Ne=Ne, tm=tm),
        out_shape=(jax.ShapeDtypeStruct((Mp, Dp), jnp.float32),
                   jax.ShapeDtypeStruct((1, 1), jnp.float32)),
        grid=(Mp // tm,),
        in_specs=[pl.BlockSpec((tm, Dp), lambda i: (i, 0)),
                  pl.BlockSpec((Dp, Nep), lambda i: (0, 0)),
                  pl.BlockSpec((Nep, Dp), lambda i: (0, 0))],
        out_specs=(pl.BlockSpec((tm, Dp), lambda i: (i, 0)),
                   pl.BlockSpec((1, 1), lambda i: (0, 0))),
        scratch_shapes=[pltpu.VMEM((1, 1), jnp.float32)],
        compiler_params=pltpu.CompilerParams(dimension_semantics=("arbitrary",)),
    )


def quantize(x_flat, codebook):
    """x_flat: (M, D) f32; codebook: (Ne, D) raw embedding table."""
    M, D = x_flat.shape
    Ne = codebook.shape[0]
    en = (codebook /
          jnp.sqrt(jnp.sum(codebook * codebook, axis=1, keepdims=True))).T  # (D, Ne)
    Dp = _round_up(D, 128)
    Nep = _round_up(Ne, 128)
    tm = 256 if M >= 256 else _round_up(M, 8)
    Mp = _round_up(M, tm)
    x_p = jnp.pad(x_flat, ((0, Mp - M), (0, Dp - D)))
    en_p = jnp.pad(en, ((0, Dp - D), (0, Nep - Ne)))
    w_p = jnp.pad(codebook, ((0, Nep - Ne), (0, Dp - D)))
    q_p, diff = _quantize_call(Mp, Dp, Nep, tm, M, D, Ne)(x_p, en_p, w_p)
    return q_p[:M, :D], diff


# --------------------------------------------------------------------------
# GRU recurrence kernel (both directions, fused gates, streamed over T)
# --------------------------------------------------------------------------

def _gru_kernel(xgf_ref, xgb_ref, h0_ref, wf_ref, wb_ref, bf_ref, bb_ref,
                yf_ref, yb_ref, hf_scr, hb_scr, *, H):
    @pl.when(pl.program_id(0) == 0)
    def _():
        hf_scr[...] = h0_ref[0]
        hb_scr[...] = h0_ref[1]

    tT = xgf_ref.shape[0]

    def gate(xg, g, h_prev):
        r = jax.nn.sigmoid(xg[:, 0:H] + g[:, 0:H])
        z = jax.nn.sigmoid(xg[:, H:2 * H] + g[:, H:2 * H])
        n = jnp.tanh(xg[:, 2 * H:3 * H] + r * g[:, 2 * H:3 * H])
        return (1.0 - z) * n + z * h_prev

    def step(t, carry):
        hf = hf_scr[...]
        hb = hb_scr[...]
        gf = jnp.dot(hf.astype(jnp.bfloat16), wf_ref[...],
                     preferred_element_type=jnp.float32) + bf_ref[...]
        gb = jnp.dot(hb.astype(jnp.bfloat16), wb_ref[...],
                     preferred_element_type=jnp.float32) + bb_ref[...]
        hf_new = gate(xgf_ref[t], gf, hf)
        hb_new = gate(xgb_ref[t], gb, hb)
        hf_scr[...] = hf_new
        hb_scr[...] = hb_new
        yf_ref[t] = hf_new
        yb_ref[t] = hb_new
        return carry

    lax.fori_loop(0, tT, step, 0)


@functools.lru_cache(maxsize=None)
def _gru_call(T, tT, B, H):
    return pl.pallas_call(
        functools.partial(_gru_kernel, H=H),
        out_shape=(jax.ShapeDtypeStruct((T, B, H), jnp.float32),
                   jax.ShapeDtypeStruct((T, B, H), jnp.float32)),
        grid=(T // tT,),
        in_specs=[pl.BlockSpec((tT, B, 3 * H), lambda i: (i, 0, 0)),
                  pl.BlockSpec((tT, B, 3 * H), lambda i: (i, 0, 0)),
                  pl.BlockSpec((2, B, H), lambda i: (0, 0, 0)),
                  pl.BlockSpec((H, 3 * H), lambda i: (0, 0)),
                  pl.BlockSpec((H, 3 * H), lambda i: (0, 0)),
                  pl.BlockSpec((1, 3 * H), lambda i: (0, 0)),
                  pl.BlockSpec((1, 3 * H), lambda i: (0, 0))],
        out_specs=(pl.BlockSpec((tT, B, H), lambda i: (i, 0, 0)),
                   pl.BlockSpec((tT, B, H), lambda i: (i, 0, 0))),
        scratch_shapes=[pltpu.VMEM((B, H), jnp.float32),
                        pltpu.VMEM((B, H), jnp.float32)],
        compiler_params=pltpu.CompilerParams(dimension_semantics=("arbitrary",)),
    )


def bigru(r_in, h0, pf, pb):
    """Bidirectional single-layer GRU; returns sum of both directions (B,T,H)."""
    B, T, H = r_in.shape
    flat = r_in.reshape(B * T, H)
    # Fuse the forward + backward input projections into one lane-dense matmul.
    w_ih = jnp.concatenate([pf['w_ih'].T, pb['w_ih'].T], axis=1)     # (H, 6H)
    b_ih = jnp.concatenate([pf['b_ih'], pb['b_ih']], axis=0)         # (6H,)
    xp = matmul_bias(flat, w_ih, b_ih).reshape(B, T, 6 * H)
    xgf = jnp.transpose(xp[:, :, :3 * H], (1, 0, 2))                 # (T, B, 3H)
    xgb = jnp.transpose(xp[:, ::-1, 3 * H:], (1, 0, 2))              # reversed time
    wf = pf['w_hh'].T.astype(jnp.bfloat16)                           # (H, 3H)
    wb = pb['w_hh'].T.astype(jnp.bfloat16)
    bf = pf['b_hh'].reshape(1, 3 * H)
    bb = pb['b_hh'].reshape(1, 3 * H)
    tT = _seq_chunk(T, 128)
    yf, yb = _gru_call(T, tT, B, H)(xgf, xgb, h0, wf, wb, bf, bb)
    yf = jnp.transpose(yf, (1, 0, 2))                                # (B, T, H)
    yb = jnp.transpose(yb, (1, 0, 2))[:, ::-1, :]
    return yf + yb


# --------------------------------------------------------------------------
# Module forwards
# --------------------------------------------------------------------------

def rcblock_forward(x, p, num_groups, key):
    B, C, T = x.shape
    hidden = jax.random.normal(key, (2, B, C), dtype=jnp.float32)  # init_hidden ~ N(0,1)
    r_in = jnp.transpose(x, (0, 2, 1))                             # (B, T, C)
    r_btc = bigru(r_in, hidden, p['gru_f'], p['gru_b'])
    r = jnp.transpose(r_btc, (0, 2, 1))                            # (B, C, T)
    c = conv1d_gn_lrelu(r, p['rc_conv_w'], p['rc_conv_b'],
                        p['rc_gn_g'], p['rc_gn_b'], padding=1,
                        conv_groups=num_groups, gn_groups=num_groups)
    return x + r + c


def gblock_forward(x, p, num_groups, key):
    h = conv1d_gn_lrelu(x, p['conv_in_w'], p['conv_in_b'],
                        p['gn1_g'], p['gn1_b'], padding=1,
                        conv_groups=1, gn_groups=num_groups)
    h = rcblock_forward(h, p, num_groups, key)
    h = conv1d(h, p['conv_out_w'], p['conv_out_b'], padding=1)
    return h


def decoder_forward(q_after, sp_embed, dec_p, num_groups, key):
    q = q_after[::-1]
    sp = sp_embed[::-1]
    keys = jax.random.split(key, 9)
    x = 0.0
    k = 0
    for i in range(3):
        x = x + gblock_forward(q[i] + sp[i], dec_p['res'][i], num_groups, keys[k]); k += 1
        x = jnp.repeat(x, 2, axis=2)      # F.interpolate(scale_factor=2, mode='nearest')
        x = x + gblock_forward(x, dec_p['block'][i], num_groups, keys[k]); k += 1
        x = jnp.concatenate(
            [x, x + gblock_forward(x, dec_p['refine'][i], num_groups, keys[k])], axis=1)
        k += 1
    return x


def encode(x, params):
    q_list, sp_list, std_list = [], [], []
    diff_total = jnp.zeros((1, 1), jnp.float32)
    for i in range(3):
        ep = params['enc'][i]
        x = conv1d(x, ep['w1'], ep['b1'], stride=2, padding=1, act=True)  # conv + LeakyReLU
        x = conv1d(x, ep['w2'], ep['b2'], stride=1, padding=1)
        B, C, T = x.shape
        xn, std = _encode_norm_call(B, C, T)(x)
        std_list.append(std)
        flat = jnp.transpose(xn, (0, 2, 1)).reshape(B * T, C)
        q_flat, diff = quantize(flat, params['quant'][i])
        q = jnp.transpose(q_flat.reshape(B, T, C), (0, 2, 1))
        sp = _sp_embed_call(B, C, T)(x, q)
        q_list.append(q)
        sp_list.append(sp)
        diff_total = diff_total + diff
    return q_list, sp_list, std_list, diff_total[0, 0]


def vc_model_forward(x, params, key):
    k_dec1, k_perm, k_dec2 = jax.random.split(key, 3)
    q_list, sp_list, std_list, diff = encode(x, params)
    dec_1 = decoder_forward(q_list, sp_list, params['dec'], 4, k_dec1)
    B = q_list[0].shape[0]
    idx = jax.random.permutation(k_perm, B)
    sp_shuffle = [s[idx] for s in sp_list]
    std_shuffle = [s[idx] for s in std_list]   # shuffled as in the reference; decoder ignores std
    del std_shuffle
    dec_2 = decoder_forward(q_list, sp_shuffle, params['dec'], 4, k_dec2)
    return dec_1, dec_2, q_list, sp_list, diff, idx


# --------------------------------------------------------------------------
# Deterministic parameter initialization (same shapes as the torch module)
# --------------------------------------------------------------------------

def init_params(key, in_channel, channel, n_embed):
    keys = iter(jax.random.split(key, 512))

    def w(shape, scale=0.1):
        return (jax.random.normal(next(keys), shape) * scale).astype(jnp.float32)

    zeros = lambda s: jnp.zeros(s, jnp.float32)
    ones = lambda s: jnp.ones(s, jnp.float32)

    def gru_dir(mfd):
        return dict(w_ih=w((3 * mfd, mfd)), w_hh=w((3 * mfd, mfd)),
                    b_ih=zeros((3 * mfd,)), b_hh=zeros((3 * mfd,)))

    def gblock(in_dim, out_dim, mfd, num_groups):
        return dict(
            conv_in_w=w((mfd, in_dim, 3)), conv_in_b=zeros((mfd,)),
            gn1_g=ones((mfd,)), gn1_b=zeros((mfd,)),
            gru_f=gru_dir(mfd), gru_b=gru_dir(mfd),
            rc_conv_w=w((mfd, mfd // num_groups, 3)), rc_conv_b=zeros((mfd,)),
            rc_gn_g=ones((mfd,)), rc_gn_b=zeros((mfd,)),
            conv_out_w=w((out_dim, mfd, 3)), conv_out_b=zeros((out_dim,)))

    params = {'enc': [], 'quant': []}
    for i in range(3):
        cin = in_channel // 2 ** i
        cout = in_channel // 2 ** (i + 1)
        params['enc'].append(dict(w1=w((channel, cin, 4)), b1=zeros((channel,)),
                                  w2=w((cout, channel, 3)), b2=zeros((cout,))))
        params['quant'].append(w((n_embed // 2 ** (2 - i), in_channel // 2 ** (i + 1)),
                                 scale=1.0))
    num_groups = 4
    rev_dims = [in_channel // 8, in_channel // 4, in_channel // 2]  # decoder iteration order
    params['dec'] = dict(
        res=[gblock(d, d, channel, num_groups) for d in rev_dims],
        block=[gblock(d, d, channel, num_groups) for d in rev_dims],
        refine=[gblock(d, d, channel, num_groups) for d in rev_dims])
    return params


# --------------------------------------------------------------------------

if __name__ == "__main__":
    in_channel, channel, n_embed = 16, 16, 16   # small analog of (80, 512, 128)
    B, T = 2, 16
    key = jax.random.PRNGKey(0)
    kp, kx, kf = jax.random.split(key, 3)
    params = init_params(kp, in_channel, channel, n_embed)
    x = jax.random.normal(kx, (B, in_channel, T), dtype=jnp.float32)

    dec_1, dec_2, enc_b, sp_embed, diff, idx = vc_model_forward(x, params, kf)
    jax.block_until_ready((dec_1, dec_2, diff, idx))

    assert dec_1.shape == (B, in_channel, T), dec_1.shape
    assert dec_2.shape == (B, in_channel, T), dec_2.shape
    assert enc_b[0].shape == (B, in_channel // 2, T // 2)
    assert sp_embed[0].shape == (B, in_channel // 2, 1)
    print("KERNEL_OK")
</pallas_src>

<mosaic_0001>
module attributes {stable_mosaic.version = 11 : i64} {
  func.func @_matmul_kernel(%arg0: i32, %arg1: i32, %arg2: i32, %arg3: memref<16x128xbf16, #tpu.memory_space<vmem>>, %arg4: memref<128x128xbf16, #tpu.memory_space<vmem>>, %arg5: memref<1x128xf32, #tpu.memory_space<vmem>>, %arg6: memref<16x128xf32, #tpu.memory_space<vmem>>, %arg7: memref<16x128xf32, #tpu.memory_space<vmem>>) attributes {dimension_semantics = [#tpu.dimension_semantics<parallel>, #tpu.dimension_semantics<parallel>, #tpu.dimension_semantics<arbitrary>], iteration_bounds = array<i64: 1, 1, 1>, scalar_prefetch = 0 : i64, scratch_operands = 1 : i64, tpu.core_type = #tpu.core_type<tc>, window_params = [{transform_indices = @transform_0, window_bounds = array<i64: 16, 128>}, {transform_indices = @transform_1, window_bounds = array<i64: 128, 128>}, {transform_indices = @transform_2, window_bounds = array<i64: 1, 128>}, {transform_indices = @transform_3, window_bounds = array<i64: 16, 128>}]} {
    %c0_i32 = arith.constant 0 : i32
    %0 = arith.cmpi eq, %arg2, %c0_i32 : i32
    %1 = arith.extui %0 : i1 to i32
    %c0_i32_0 = arith.constant 0 : i32
    %2 = arith.cmpi ne, %1, %c0_i32_0 : i32
    scf.if %2 {
      %cst_10 = arith.constant 0.000000e+00 : f32
      %12 = vector.broadcast %cst_10 : f32 to vector<16x128xf32>
      %c0_11 = arith.constant 0 : index
      %c0_12 = arith.constant 0 : index
      %13 = vector.load %arg7[%c0_11, %c0_12] : memref<16x128xf32, #tpu.memory_space<vmem>>, vector<16x128xf32>
      tpu.vector_store %arg7[%c0_11, %c0_12], %12 {strides = array<i32>} : memref<16x128xf32, #tpu.memory_space<vmem>>, vector<16x128xf32>,
    } else {
    }
    %c0 = arith.constant 0 : index
    %c0_1 = arith.constant 0 : index
    %3 = vector.load %arg7[%c0, %c0_1] : memref<16x128xf32, #tpu.memory_space<vmem>>, vector<16x128xf32>
    %c0_2 = arith.constant 0 : index
    %c0_3 = arith.constant 0 : index
    %4 = vector.load %arg3[%c0_2, %c0_3] : memref<16x128xbf16, #tpu.memory_space<vmem>>, vector<16x128xbf16>
    %c0_4 = arith.constant 0 : index
    %c0_5 = arith.constant 0 : index
    %5 = vector.load %arg4[%c0_4, %c0_5] : memref<128x128xbf16, #tpu.memory_space<vmem>>, vector<128x128xbf16>
    %cst = arith.constant dense<0.000000e+00> : vector<16x128xf32>
    %6 = tpu.matmul %4, %5, %cst {dimension_numbers = #tpu.dot_dimension_numbers<[1], [0], [0], [1], [0, 0, 1, 1], [], []>} : vector<16x128xbf16>, vector<128x128xbf16>, vector<16x128xf32> -> vector<16x128xf32>
    %7 = arith.addf %3, %6 : vector<16x128xf32>
    %c0_6 = arith.constant 0 : index
    %c0_7 = arith.constant 0 : index
    %8 = vector.load %arg7[%c0_6, %c0_7] : memref<16x128xf32, #tpu.memory_space<vmem>>, vector<16x128xf32>
    tpu.vector_store %arg7[%c0_6, %c0_7], %7 {strides = array<i32>} : memref<16x128xf32, #tpu.memory_space<vmem>>, vector<16x128xf32>,
    %c0_i32_8 = arith.constant 0 : i32
    %9 = arith.cmpi eq, %arg2, %c0_i32_8 : i32
    %10 = arith.extui %9 : i1 to i32
    %c0_i32_9 = arith.constant 0 : i32
    %11 = arith.cmpi ne, %10, %c0_i32_9 : i32
    scf.if %11 {
      %c0_10 = arith.constant 0 : index
      %c0_11 = arith.constant 0 : index
      %12 = vector.load %arg7[%c0_10, %c0_11] : memref<16x128xf32, #tpu.memory_space<vmem>>, vector<16x128xf32>
      %c0_12 = arith.constant 0 : index
      %c0_13 = arith.constant 0 : index
      %13 = vector.load %arg5[%c0_12, %c0_13] : memref<1x128xf32, #tpu.memory_space<vmem>>, vector<1x128xf32>
      %14 = vector.broadcast %13 : vector<1x128xf32> to vector<16x128xf32>
      %15 = arith.addf %12, %14 : vector<16x128xf32>
      %cst_14 = arith.constant 0.00999999977 : f32
      %16 = vector.broadcast %cst_14 : f32 to vector<16x128xf32>
      %17 = arith.mulf %16, %15 : vector<16x128xf32>
      %18 = arith.maximumf %15, %17 : vector<16x128xf32>
      %c0_15 = arith.constant 0 : index
      %c0_16 = arith.constant 0 : index
      %19 = vector.load %arg6[%c0_15, %c0_16] : memref<16x128xf32, #tpu.memory_space<vmem>>, vector<16x128xf32>
      tpu.vector_store %arg6[%c0_15, %c0_16], %18 {strides = array<i32>} : memref<16x128xf32, #tpu.memory_space<vmem>>, vector<16x128xf32>,
    } else {
    }
    return
  }
  func.func @transform_0(%arg0: i32, %arg1: i32, %arg2: i32) -> (i32, i32) {
    %c0_i32 = arith.constant 0 : i32
    return %arg0, %arg2 : i32, i32
  }
  func.func @transform_1(%arg0: i32, %arg1: i32, %arg2: i32) -> (i32, i32) {
    %c0_i32 = arith.constant 0 : i32
    return %arg2, %arg1 : i32, i32
  }
  func.func @transform_2(%arg0: i32, %arg1: i32, %arg2: i32) -> (i32, i32) {
    %c0_i32 = arith.constant 0 : i32
    %c0_i32_0 = arith.constant 0 : i32
    return %c0_i32, %arg1 : i32, i32
  }
  func.func @transform_3(%arg0: i32, %arg1: i32, %arg2: i32) -> (i32, i32) {
    %c0_i32 = arith.constant 0 : i32
    return %arg0, %arg1 : i32, i32
  }
}

</mosaic_0001>

<llo_original>
// kernel: tpu_custom_call.1
$region0: #{tpu_custom_call.1}
  #allocation0 [shape = 'u32[]', space=smem, size = 0x4, offset = 0x4, fixed_abs, tag = 'smem constant byte address 0x4 - core index']
  #allocation1 [shape = 'u32[144,128]{1,0:T(1,128)}', space=vmem, size = 0x12000, scoped, tag = 'internal scratch']
  #allocation2 [shape = 'f32[16,128]{1,0:T(8,128)}', space=vmem, size = 0x2000, scoped, tag = 'scratch operand']
  %s0 = inlined_call_operand.hbm [shape: bf16[16,128], index: 0, kind: input, shape index: {}]
  %s1 = inlined_call_operand.hbm [shape: bf16[128,128], index: 1, kind: input, shape index: {}]
  %s2 = inlined_call_operand.vmem [shape: f32[1,128], index: 2, kind: input, shape index: {}]
  %s3 = inlined_call_operand.hbm [shape: f32[16,128], index: 3, kind: output, shape index: {}]
  %s4 = sld [smem:[#allocation0]]
  $region38: #{tpu_custom_call.1} parent=0
    _
  %s6 = ssub.s32 1, %s4
  %s7 = scalar_select 0, %s6, %s4
  $region1: #{tpu_custom_call.1} parent=0
    #allocation3 [shape = 'u8[4096]{0}', space=vmem, size = 0x1000, scoped, tag = 'input window, operand 0, single buffered']
    #allocation4 [shape = 's32[1]{0}', space=sflag, size = 0x4, scoped, tag = 'scoped memory for tpu_custom_call.1']
    #allocation5 [shape = 's32[1]{0}', space=sflag, size = 0x4, scoped, tag = 'scoped memory for tpu_custom_call.1']
    #allocation6 [shape = 'u8[32768]{0}', space=vmem, size = 0x8000, scoped, tag = 'input window, operand 1, single buffered']
    #allocation7 [shape = 's32[1]{0}', space=sflag, size = 0x4, scoped, tag = 'scoped memory for tpu_custom_call.1']
    #allocation8 [shape = 'u8[8192]{0}', space=vmem, size = 0x2000, scoped, tag = 'output window, operand 0, single buffered']
    %8 = vsyncpa [#allocation4], 0
    %9 = vsyncpa [#allocation7], 0
    %10 = vsyncpa [#allocation5], 0
    // Predicated region
    $region2: #{tpu_custom_call.1} parent=1 // pred_check
      _
    $region3: #{tpu_custom_call.1} parent=1 // pred_check_branch
      %12 = sbr.rel (0) target = $region5
    $region4: #{tpu_custom_call.1} parent=1 // pred_region
      %s14 = ssub.s32 128, 128
      %15 = vsyncadd [#allocation4], %s14
      %s16 = sshll.u32 [#allocation3], 4
      %s17 = int_to_ptr.vmem [resolvable:$true] %s16
      %22 = dma.hbm_to_vmem [thread:$0]  %s0, 128, %s17, [#allocation4], 64, 64, 4
    $region5: #{tpu_custom_call.1} parent=1 // pred_fallthru
      _
    // Predicated region
    $region6: #{tpu_custom_call.1} parent=1 // pred_check
      _
    $region7: #{tpu_custom_call.1} parent=1 // pred_check_branch
      %24 = sbr.rel (0) target = $region9
    $region8: #{tpu_custom_call.1} parent=1 // pred_region
      %s26 = ssub.s32 1024, 1024
      %27 = vsyncadd [#allocation7], %s26
      %s28 = sshll.u32 [#allocation6], 4
      %s29 = int_to_ptr.vmem [resolvable:$true] %s28
      %34 = dma.hbm_to_vmem [thread:$0]  %s1, 1024, %s29, [#allocation7], 64, 64, 4
    $region9: #{tpu_custom_call.1} parent=1 // pred_fallthru
      _
    // Predicated region
    $region10: #{tpu_custom_call.1} parent=1 // pred_check
      _
    $region11: #{tpu_custom_call.1} parent=1 // pred_check_branch
      %36 = sbr.rel (0) target = $region13
    $region12: #{tpu_custom_call.1} parent=1 // pred_region
      _
    $region13: #{tpu_custom_call.1} parent=1 // pred_fallthru
      _
    // Predicated region
    $region14: #{tpu_custom_call.1} parent=1 // pred_check
      _
    $region15: #{tpu_custom_call.1} parent=1 // pred_check_branch
      %38 = sbr.rel (0) target = $region17
    $region16: #{tpu_custom_call.1} parent=1 // pred_region
      %39 = dma.done [#allocation4], 128
    $region17: #{tpu_custom_call.1} parent=1 // pred_fallthru
      _
    // Predicated region
    $region18: #{tpu_custom_call.1} parent=1 // pred_check
      _
    $region19: #{tpu_custom_call.1} parent=1 // pred_check_branch
      %41 = sbr.rel (0) target = $region21
    $region20: #{tpu_custom_call.1} parent=1 // pred_region
      %42 = dma.done [#allocation7], 1024
    $region21: #{tpu_custom_call.1} parent=1 // pred_fallthru
      _
    %p44 = scmp.eq.s32.totalorder 0, 0
    // Predicated region
    $region22: #{tpu_custom_call.1} parent=1 // pred_check
      %p45 = pneg %p44
    $region23: #{tpu_custom_call.1} parent=1 // pred_check_branch
      %47 = sbr.rel (%p45) target = $region25
    $region24: #{tpu_custom_call.1} parent=1 // pred_region
      %48 = vst [vmem:[#allocation2] sm:$0xff] 0.0
      %49 = vst [vmem:[#allocation2 + $0x8] sm:$0xff] 0.0
    $region25: #{tpu_custom_call.1} parent=1 // pred_fallthru
      _
    %v50 = vld [vmem:[#allocation2] sm:$0xff]
    %v51 = vld [vmem:[#allocation2 + $0x8] sm:$0xff]
    %v52 = vld [vmem:[#allocation3] sm:$0xf]
    %v53 = vld [vmem:[#allocation3 + $0x4] sm:$0xf]
    %v54 = vld [vmem:[#allocation6] sm:$0xf]
    %v55 = vld [vmem:[#allocation6 + $0x4] sm:$0xf]
    %v56 = vld [vmem:[#allocation6 + $0x8] sm:$0xf]
    %v57 = vld [vmem:[#allocation6 + $0xc] sm:$0xf]
    %v58 = vld [vmem:[#allocation6 + $0x10] sm:$0xf]
    %v59 = vld [vmem:[#allocation6 + $0x14] sm:$0xf]
    %v60 = vld [vmem:[#allocation6 + $0x18] sm:$0xf]
    %v61 = vld [vmem:[#allocation6 + $0x1c] sm:$0xf]
    %v62 = vld [vmem:[#allocation6 + $0x20] sm:$0xf]
    %v63 = vld [vmem:[#allocation6 + $0x24] sm:$0xf]
    %v64 = vld [vmem:[#allocation6 + $0x28] sm:$0xf]
    %v65 = vld [vmem:[#allocation6 + $0x2c] sm:$0xf]
    %v66 = vld [vmem:[#allocation6 + $0x30] sm:$0xf]
    %v67 = vld [vmem:[#allocation6 + $0x34] sm:$0xf]
    %v68 = vld [vmem:[#allocation6 + $0x38] sm:$0xf]
    %v69 = vld [vmem:[#allocation6 + $0x3c] sm:$0xf]
    %v72 = vunpack.c.l.b16 %v52
    %v73 = vunpack.c.l.b16 %v53
    %v74 = vpack.c.b16 %v73, %v72
    %v92 = vunpack.c.l.b16 %v54
    %v93 = vunpack.c.l.b16 %v55
    %v94 = vunpack.c.l.b16 %v56
    %v95 = vunpack.c.l.b16 %v57
    %v96 = vunpack.c.l.b16 %v58
    %v97 = vunpack.c.l.b16 %v59
    %v98 = vunpack.c.l.b16 %v60
    %v99 = vunpack.c.l.b16 %v61
    %v100 = vunpack.c.l.b16 %v62
    %v101 = vunpack.c.l.b16 %v63
    %v102 = vunpack.c.l.b16 %v64
    %v103 = vunpack.c.l.b16 %v65
    %v104 = vunpack.c.l.b16 %v66
    %v105 = vunpack.c.l.b16 %v67
    %v106 = vunpack.c.l.b16 %v68
    %v107 = vunpack.c.l.b16 %v69
    %v108 = vpack.c.b16 %v93, %v92
    %v109 = vpack.c.b16 %v95, %v94
    %v110 = vpack.c.b16 %v97, %v96
    %v111 = vpack.c.b16 %v99, %v98
    %v112 = vpack.c.b16 %v101, %v100
    %v113 = vpack.c.b16 %v103, %v102
    %v114 = vpack.c.b16 %v105, %v104
    %v115 = vpack.c.b16 %v107, %v106
    %124 = vmatprep.subr.bf16.mxu0 0
    %125 = vmatpush1.bf16.msra.mxu0 %v108
    %126 = vmatprep.subr.bf16.mxu0 0
    %127 = vmatpush1.bf16.msra.mxu0 %v109
    %128 = vmatprep.subr.bf16.mxu0 0
    %129 = vmatpush1.bf16.msra.mxu0 %v110
    %130 = vmatprep.subr.bf16.mxu0 0
    %131 = vmatpush1.bf16.msra.mxu0 %v111
    %132 = vmatprep.subr.bf16.mxu0 0
    %133 = vmatpush1.bf16.msra.mxu0 %v112
    %134 = vmatprep.subr.bf16.mxu0 0
    %135 = vmatpush1.bf16.msra.mxu0 %v113
    %136 = vmatprep.subr.bf16.mxu0 0
    %137 = vmatpush1.bf16.msra.mxu0 %v114
    %138 = vmatprep.subr.bf16.mxu0 0
    %139 = vmatpush1.bf16.msra.mxu0 %v115
    %140 = vmatprep.subr.bf16.mxu0 0
    %141 = vmatpush1.bf16.msra.mxu0 0
    %142 = vmatprep.subr.bf16.mxu0 0
    %143 = vmatpush1.bf16.msra.mxu0 0
    %144 = vmatprep.subr.bf16.mxu0 0
    %145 = vmatpush1.bf16.msra.mxu0 0
    %146 = vmatprep.subr.bf16.mxu0 0
    %147 = vmatpush1.bf16.msra.mxu0 0
    %148 = vmatprep.subr.bf16.mxu0 0
    %149 = vmatpush1.bf16.msra.mxu0 0
    %150 = vmatprep.subr.bf16.mxu0 0
    %151 = vmatpush1.bf16.msra.mxu0 0
    %152 = vmatprep.subr.bf16.mxu0 0
    %153 = vmatpush1.bf16.msra.mxu0 0
    %154 = vmatprep.subr.bf16.mxu0 0
    %155 = vmatpush1.bf16.msra.mxu0 0
    %156 = vmatprep.mubr.bf16.mxu0 0
    %157 = vmatmul.mubr.bf16.gmra.mrb[0].mxu0 %v74
    %v158 = vpop.f32.mrb[0].mxu0
    %v159 = vadd.f32 0.0, %v158
    %v160 = vpop.f32.mrb[0].mxu0
    %v161 = vpop.f32.mrb[0].mxu0
    %v162 = vadd.f32 0.0, %v161
    %v163 = vpop.f32.mrb[0].mxu0
    %164 = vdwg.mxu0
    %v165 = vadd.f32 %v50, %v159
    %v166 = vadd.f32 %v51, %v162
    %167 = vst [vmem:[#allocation2] sm:$0xff] %v165
    %168 = vst [vmem:[#allocation2 + $0x8] sm:$0xff] %v166
    // Predicated region
    $region26: #{tpu_custom_call.1} parent=1 // pred_check
      %p169 = pneg %p44
    $region27: #{tpu_custom_call.1} parent=1 // pred_check_branch
      %171 = sbr.rel (%p169) target = $region29
    $region28: #{tpu_custom_call.1} parent=1 // pred_region
      %v172 = vld [vmem:[#allocation2] sm:$0xff]
      %v173 = vld [vmem:[#allocation2 + $0x8] sm:$0xff]
      %v174 = vld [vmem:[%s2] sm:$0x1]
      %v176 = vlaneseq
      %v177 = vshrl.u32 %v176, 7
      %v178 = vsub.s32 0, %v177
      %v179 = vrot.slane %v174, %v178
      %v181 = vadd.f32 %v172, %v179
      %v182 = vadd.f32 %v173, %v179
      %v183 = vmul.f32 %v181, 0.01
      %v184 = vmul.f32 %v182, 0.01
      %v185 = vmax.f32 %v181, %v183
      %v186 = vmax.f32 %v182, %v184
      %187 = vst [vmem:[#allocation8] sm:$0xff] %v185
      %188 = vst [vmem:[#allocation8 + $0x8] sm:$0xff] %v186
    $region29: #{tpu_custom_call.1} parent=1 // pred_fallthru
      _
    // Predicated region
    $region30: #{tpu_custom_call.1} parent=1 // pred_check
      _
    $region31: #{tpu_custom_call.1} parent=1 // pred_check_branch
      %190 = sbr.rel (0) target = $region33
    $region32: #{tpu_custom_call.1} parent=1 // pred_region
      %s192 = ssub.s32 256, 256
      %193 = vsyncadd [#allocation5], %s192
      %s194 = sshll.u32 [#allocation8], 4
      %s195 = int_to_ptr.vmem [resolvable:$true] %s194
      %200 = dma.vmem_to_hbm [thread:$0]  %s195, 256, %s3, [#allocation5], 128, 128, 8
    $region33: #{tpu_custom_call.1} parent=1 // pred_fallthru
      _
    // Predicated region
    $region34: #{tpu_custom_call.1} parent=1 // pred_check
      _
    $region35: #{tpu_custom_call.1} parent=1 // pred_check_branch
      %202 = sbr.rel (0) target = $region37
    $region36: #{tpu_custom_call.1} parent=1 // pred_region
      %203 = dma.done [#allocation5], 256
    $region37: #{tpu_custom_call.1} parent=1 // pred_fallthru
      _
    %204 = vsyncpa [#allocation4], 1
    %205 = vsyncpa [#allocation7], 1
    %206 = vsyncpa [#allocation5], 1

</llo_original>
